<compile_context>
chip_gen: v7x
topology: tpu7x:2x2x1
jax: 0.10.0
libtpu: 0.0.40
codegen_flags: <defaults>
</compile_context>

<pallas_src>
import jax
import jax.numpy as jnp
from jax import lax
from jax.experimental import pallas as pl
from jax.experimental.pallas import tpu as pltpu


_LANES = 512  # lane-dense slab width (multiple of 128)


def _cdiv(a: int, b: int) -> int:
    return -(-a // b)


def _min_sublane_tile(dtype) -> int:
    """Minimum legal sublane tile for this dtype (packing along sublanes)."""
    itemsize = jnp.dtype(dtype).itemsize
    return {4: 8, 2: 16, 1: 32}.get(itemsize, 8)


def _chip_tuning():
    """(max row tile, leading grid cores) per chip generation."""
    try:
        kind = jax.devices()[0].device_kind.lower()
    except Exception:
        kind = ""
    if "v7" in kind:
        # 2048x512 int32 = 4 MiB/block; 2 inputs x 2 buffers = 16 MiB, inside
        # v7x's 32 MiB default scoped VMEM.  Size-2 "parallel" axis targets the
        # two TensorCores.
        # TODO(synk): if xprof shows only one TC busy, switch the leading axis
        # to pltpu.CORE_PARALLEL; if DMA gaps remain, try pl.Buffered(3) inputs.
        return 2048, 2
    # v5e / v6e (1 TC): 1024x512 int32 = 2 MiB/block -> 8 MiB double-buffered,
    # safely under v5e's 16 MiB default scoped VMEM.
    return 1024, 1


def pallas_accuracy(prediction: jax.Array, target: jax.Array, *, tm_max=None) -> jax.Array:
    """Fraction of elements where prediction == target (classification accuracy)."""
    assert prediction.shape == target.shape, "prediction/target shape mismatch"
    total = int(prediction.size)
    if total == 0:
        return jnp.float32(0.0)

    # Single dtype so the in-kernel compare has one layout.
    if prediction.dtype != target.dtype:
        common = jnp.promote_types(prediction.dtype, target.dtype)
        prediction = prediction.astype(common)
        target = target.astype(common)

    chip_tm_max, cores = _chip_tuning()
    if tm_max is None:
        tm_max = chip_tm_max

    pred_flat = prediction.reshape(-1)  # contiguous reshape: free
    targ_flat = target.reshape(-1)

    # Rows handled by the kernel: multiple of the dtype's min sublane tile so
    # every block layout is legal.  The (< min_tile*_LANES + _LANES element)
    # remainder is summed wrapper-side -- no full-array jnp.pad copies.
    min_tile = _min_sublane_tile(prediction.dtype)
    rows = total // _LANES
    kernel_rows = (rows // min_tile) * min_tile

    if kernel_rows == 0:
        # Tiny input: plain JAX is cheaper than any kernel launch.
        count = jnp.sum((pred_flat == targ_flat).astype(jnp.int32))
        return count.astype(jnp.float32) / jnp.float32(total)

    main = kernel_rows * _LANES
    lanes = _LANES
    tm = min(int(tm_max), kernel_rows)  # multiple of min_tile (hence of 8)
    nblocks = _cdiv(kernel_rows, tm)
    steps = _cdiv(nblocks, cores)

    def kernel(pred_ref, targ_ref, out_ref):
        c = pl.program_id(0)
        i = pl.program_id(1)

        @pl.when(i == 0)
        def _():
            out_ref[...] = jnp.zeros_like(out_ref)

        # Unclamped block id: rows past `kernel_rows` (ragged last block, or a
        # core's clamped duplicate trailing step) are masked to contribute 0.
        b = c * pl.num_programs(1) + i
        valid = kernel_rows - b * tm
        row_ids = lax.broadcasted_iota(jnp.int32, (tm, lanes), 0)
        mask = row_ids < valid
        matches = ((pred_ref[...] == targ_ref[...]) & mask).astype(jnp.int32)
        # Fold (tm, lanes) onto the resident (8, lanes) accumulator with pure
        # VPU adds; the single cross-lane reduce happens once in the wrapper.
        out_ref[0] += jnp.sum(matches.reshape(tm // 8, 8, lanes), axis=0)

    def idx_map(c, i):
        # Clamp so trailing (fully masked) steps still read an in-bounds block.
        return (jnp.minimum(c * steps + i, nblocks - 1), 0)

    partials = pl.pallas_call(
        kernel,
        out_shape=jax.ShapeDtypeStruct((cores, 8, lanes), jnp.int32),
        grid_spec=pltpu.PrefetchScalarGridSpec(
            num_scalar_prefetch=0,
            grid=(cores, steps),
            in_specs=[
                pl.BlockSpec((tm, lanes), idx_map),
                pl.BlockSpec((tm, lanes), idx_map),
            ],
            out_specs=pl.BlockSpec((1, 8, lanes), lambda c, i: (c, 0, 0)),
        ),
        compiler_params=pltpu.CompilerParams(
            dimension_semantics=("parallel", "arbitrary"),
        ),
    )(
        pred_flat[:main].reshape(kernel_rows, lanes),
        targ_flat[:main].reshape(kernel_rows, lanes),
    )

    # Exact integer match count (int32: exact up to 2**31 - 1 elements).
    count = jnp.sum(partials)
    if main < total:
        count = count + jnp.sum((pred_flat[main:] == targ_flat[main:]).astype(jnp.int32))
    return count.astype(jnp.float32) / jnp.float32(total)


# ----------------------------------------------------------------------------
# Module wrappers mirroring the PyTorch semantics.
# ----------------------------------------------------------------------------
class BaseMetric:
    """JAX/Pallas port of pypots BaseMetric (abstract)."""

    def __init__(self, lower_better: bool = True):
        self.lower_better = lower_better

    def forward(self, prediction, target):
        raise NotImplementedError

    def __call__(self, prediction, target):
        return self.forward(prediction, target)


class Accuracy(BaseMetric):
    """pypots Accuracy: acc = calc_acc(prediction, target) = mean(pred == target)."""

    def __init__(self):
        super().__init__(lower_better=False)

    def forward(self, prediction, target):
        # TODO(synk): calc_acc expects class labels; if callers pass class
        # probabilities, argmax over the class axis before calling this.
        return pallas_accuracy(prediction, target)


if __name__ == "__main__":
    key = jax.random.PRNGKey(0)
    kp, kt = jax.random.split(key)

    # Classification-style integer labels.  Shape chosen so the Pallas kernel
    # path runs (>= 8*512 elements for int32) and the <512-element wrapper tail
    # is exercised (16896 = 33*512, kernel handles 32 rows, tail = 512 elems).
    shape = (2, 4, 33, 64)
    num_classes = 10
    prediction = jax.random.randint(kp, shape, 0, num_classes, dtype=jnp.int32)
    target = jax.random.randint(kt, shape, 0, num_classes, dtype=jnp.int32)

    # Base class behaves exactly like PyTorch: forward raises.
    base = BaseMetric(lower_better=True)
    try:
        base(prediction, target)
        raise AssertionError("BaseMetric.forward should raise NotImplementedError")
    except NotImplementedError:
        pass

    # Concrete metric exercises the Pallas kernel.
    metric = Accuracy()
    assert metric.lower_better is False
    result = jax.block_until_ready(metric(prediction, target))
    ref = jnp.mean((prediction == target).astype(jnp.float32))
    assert jnp.allclose(result, ref, rtol=1e-6, atol=1e-6), (result, ref)

    # Second case: multiple grid steps + in-kernel masked ragged last block
    # (small explicit row tile to exercise that path at a small size).
    shape2 = (2, 4, 48, 64)  # 24576 elements -> 48 rows of 512
    p2 = jax.random.randint(kp, shape2, 0, num_classes, dtype=jnp.int32)
    t2 = jax.random.randint(kt, shape2, 0, num_classes, dtype=jnp.int32)
    r2 = jax.block_until_ready(pallas_accuracy(p2, t2, tm_max=32))
    ref2 = jnp.mean((p2 == t2).astype(jnp.float32))
    assert jnp.allclose(r2, ref2, rtol=1e-6, atol=1e-6), (r2, ref2)

    print("KERNEL_OK")
</pallas_src>

<mosaic_0001>
module attributes {stable_mosaic.version = 11 : i64} {
  func.func @kernel(%arg0: i32, %arg1: i32, %arg2: memref<32x512xi32, #tpu.memory_space<vmem>>, %arg3: memref<32x512xi32, #tpu.memory_space<vmem>>, %arg4: memref<1x8x512xi32, #tpu.memory_space<vmem>>) attributes {dimension_semantics = [#tpu.dimension_semantics<parallel>, #tpu.dimension_semantics<arbitrary>], iteration_bounds = array<i64: 1, 1>, scalar_prefetch = 0 : i64, scratch_operands = 0 : i64, tpu.core_type = #tpu.core_type<tc>, window_params = [{transform_indices = @transform_0, window_bounds = array<i64: 32, 512>}, {transform_indices = @transform_1, window_bounds = array<i64: 32, 512>}, {transform_indices = @transform_2, window_bounds = array<i64: 1, 8, 512>}]} {
    %c0_i32 = arith.constant 0 : i32
    %0 = arith.cmpi eq, %arg1, %c0_i32 : i32
    %1 = arith.extui %0 : i1 to i32
    %c0_i32_0 = arith.constant 0 : i32
    %2 = arith.cmpi ne, %1, %c0_i32_0 : i32
    scf.if %2 {
      %c0_i32_11 = arith.constant 0 : i32
      %23 = vector.broadcast %c0_i32_11 : i32 to vector<1x8x512xi32>
      %c0_12 = arith.constant 0 : index
      %c0_13 = arith.constant 0 : index
      %c0_14 = arith.constant 0 : index
      %24 = vector.load %arg4[%c0_12, %c0_13, %c0_14] : memref<1x8x512xi32, #tpu.memory_space<vmem>>, vector<1x8x512xi32>
      tpu.vector_store %arg4[%c0_12, %c0_13, %c0_14], %23 {strides = array<i32>} : memref<1x8x512xi32, #tpu.memory_space<vmem>>, vector<1x8x512xi32>,
    } else {
    }
    %c1_i32 = arith.constant 1 : i32
    %3 = arith.muli %arg0, %c1_i32 : i32
    %4 = arith.addi %3, %arg1 : i32
    %c32_i32 = arith.constant 32 : i32
    %5 = arith.muli %4, %c32_i32 : i32
    %c32_i32_1 = arith.constant 32 : i32
    %6 = arith.subi %c32_i32_1, %5 : i32
    %7 = tpu.iota {dimensions = array<i32: 0>} : vector<32x512xi32>
    %8 = vector.broadcast %6 : i32 to vector<32x512xi32>
    %9 = arith.cmpi slt, %7, %8 : vector<32x512xi32>
    %c0 = arith.constant 0 : index
    %c0_2 = arith.constant 0 : index
    %10 = vector.load %arg2[%c0, %c0_2] : memref<32x512xi32, #tpu.memory_space<vmem>>, vector<32x512xi32>
    %c0_3 = arith.constant 0 : index
    %c0_4 = arith.constant 0 : index
    %11 = vector.load %arg3[%c0_3, %c0_4] : memref<32x512xi32, #tpu.memory_space<vmem>>, vector<32x512xi32>
    %12 = arith.cmpi eq, %10, %11 : vector<32x512xi32>
    %13 = arith.andi %12, %9 : vector<32x512xi1>
    %14 = arith.extui %13 : vector<32x512xi1> to vector<32x512xi32>
    %c0_5 = arith.constant 0 : index
    %c0_6 = arith.constant 0 : index
    %c0_7 = arith.constant 0 : index
    %15 = vector.load %arg4[%c0_5, %c0_6, %c0_7] : memref<1x8x512xi32, #tpu.memory_space<vmem>>, vector<1x8x512xi32>
    %16 = vector.shape_cast %15 : vector<1x8x512xi32> to vector<8x512xi32>
    %17 = vector.shape_cast %14 : vector<32x512xi32> to vector<4x8x512xi32>
    %cst = arith.constant dense<0> : vector<8x512xi32>
    %18 = vector.multi_reduction <add>, %17, %cst [0] : vector<4x8x512xi32> to vector<8x512xi32>
    %19 = arith.addi %16, %18 : vector<8x512xi32>
    %c0_8 = arith.constant 0 : index
    %c0_9 = arith.constant 0 : index
    %c0_10 = arith.constant 0 : index
    %20 = vector.load %arg4[%c0_8, %c0_9, %c0_10] : memref<1x8x512xi32, #tpu.memory_space<vmem>>, vector<1x8x512xi32>
    %21 = vector.shape_cast %20 : vector<1x8x512xi32> to vector<8x512xi32>
    %22 = vector.shape_cast %19 : vector<8x512xi32> to vector<1x8x512xi32>
    tpu.vector_store %arg4[%c0_8, %c0_9, %c0_10], %22 {strides = array<i32>} : memref<1x8x512xi32, #tpu.memory_space<vmem>>, vector<1x8x512xi32>,
    return
  }
  func.func @transform_0(%arg0: i32, %arg1: i32) -> (i32, i32) {
    %c1_i32 = arith.constant 1 : i32
    %0 = arith.muli %arg0, %c1_i32 : i32
    %1 = arith.addi %0, %arg1 : i32
    %c0_i32 = arith.constant 0 : i32
    %2 = arith.minsi %1, %c0_i32 : i32
    %c0_i32_0 = arith.constant 0 : i32
    %c0_i32_1 = arith.constant 0 : i32
    return %2, %c0_i32_0 : i32, i32
  }
  func.func @transform_1(%arg0: i32, %arg1: i32) -> (i32, i32) {
    %c1_i32 = arith.constant 1 : i32
    %0 = arith.muli %arg0, %c1_i32 : i32
    %1 = arith.addi %0, %arg1 : i32
    %c0_i32 = arith.constant 0 : i32
    %2 = arith.minsi %1, %c0_i32 : i32
    %c0_i32_0 = arith.constant 0 : i32
    %c0_i32_1 = arith.constant 0 : i32
    return %2, %c0_i32_0 : i32, i32
  }
  func.func @transform_2(%arg0: i32, %arg1: i32) -> (i32, i32, i32) {
    %c0_i32 = arith.constant 0 : i32
    %c0_i32_0 = arith.constant 0 : i32
    %c0_i32_1 = arith.constant 0 : i32
    return %arg0, %c0_i32, %c0_i32_0 : i32, i32, i32
  }
}

</mosaic_0001>

<llo_original>
// kernel: tpu_custom_call.1
$region0: #{tpu_custom_call.1}
  #allocation0 [shape = 'u32[]', space=smem, size = 0x4, offset = 0x4, fixed_abs, tag = 'smem constant byte address 0x4 - core index']
  #allocation1 [shape = 'u32[144,128]{1,0:T(1,128)}', space=vmem, size = 0x12000, scoped, tag = 'internal scratch']
  %s0 = inlined_call_operand.hbm [shape: s32[32,512], index: 0, kind: input, shape index: {}]
  %s1 = inlined_call_operand.hbm [shape: s32[32,512], index: 1, kind: input, shape index: {}]
  %s2 = inlined_call_operand.hbm [shape: s32[1,8,512], index: 2, kind: output, shape index: {}]
  %s3 = sld [smem:[#allocation0]]
  $region30: #{tpu_custom_call.1} parent=0
    _
  %s5 = ssub.s32 1, %s3
  %s6 = scalar_select 0, %s5, %s3
  $region1: #{tpu_custom_call.1} parent=0
    #allocation2 [shape = 'u8[65536]{0}', space=vmem, size = 0x10000, scoped, tag = 'input window, operand 0, single buffered']
    #allocation3 [shape = 's32[1]{0}', space=sflag, size = 0x4, scoped, tag = 'scoped memory for tpu_custom_call.1']
    #allocation4 [shape = 's32[1]{0}', space=sflag, size = 0x4, scoped, tag = 'scoped memory for tpu_custom_call.1']
    #allocation5 [shape = 'u8[65536]{0}', space=vmem, size = 0x10000, scoped, tag = 'input window, operand 1, single buffered']
    #allocation6 [shape = 's32[1]{0}', space=sflag, size = 0x4, scoped, tag = 'scoped memory for tpu_custom_call.1']
    #allocation7 [shape = 'u8[16384]{0}', space=vmem, size = 0x4000, scoped, tag = 'output window, operand 0, single buffered']
    %7 = vsyncpa [#allocation3], 0
    %8 = vsyncpa [#allocation6], 0
    %9 = vsyncpa [#allocation4], 0
    // Predicated region
    $region2: #{tpu_custom_call.1} parent=1 // pred_check
      _
    $region3: #{tpu_custom_call.1} parent=1 // pred_check_branch
      %11 = sbr.rel (0) target = $region5
    $region4: #{tpu_custom_call.1} parent=1 // pred_region
      %s12 = sadd.s32 0, 0
      %p13 = scmp.lt.s32.totalorder %s12, 0
      %s14 = scalar_select %p13, %s12, 0
      %s15 = smul.u32 4, %s14
      %s17 = ssub.s32 2048, 2048
      %18 = vsyncadd [#allocation3], %s17
      %s19 = smul.addr %s15, 4
      %s20 = smul.addr %s19, 128
      %s21 = scalar_lea.hbm %s0, %s20
      %s22 = sshll.u32 [#allocation2], 4
      %s23 = int_to_ptr.vmem [resolvable:$true] %s22
      %28 = dma.hbm_to_vmem [thread:$0]  %s21, 2048, %s23, [#allocation3], 512, 512, 32
    $region5: #{tpu_custom_call.1} parent=1 // pred_fallthru
      _
    // Predicated region
    $region6: #{tpu_custom_call.1} parent=1 // pred_check
      _
    $region7: #{tpu_custom_call.1} parent=1 // pred_check_branch
      %30 = sbr.rel (0) target = $region9
    $region8: #{tpu_custom_call.1} parent=1 // pred_region
      %s31 = sadd.s32 0, 0
      %p32 = scmp.lt.s32.totalorder %s31, 0
      %s33 = scalar_select %p32, %s31, 0
      %s34 = smul.u32 4, %s33
      %s36 = ssub.s32 2048, 2048
      %37 = vsyncadd [#allocation6], %s36
      %s38 = smul.addr %s34, 4
      %s39 = smul.addr %s38, 128
      %s40 = scalar_lea.hbm %s1, %s39
      %s41 = sshll.u32 [#allocation5], 4
      %s42 = int_to_ptr.vmem [resolvable:$true] %s41
      %47 = dma.hbm_to_vmem [thread:$0]  %s40, 2048, %s42, [#allocation6], 512, 512, 32
    $region9: #{tpu_custom_call.1} parent=1 // pred_fallthru
      _
    // Predicated region
    $region10: #{tpu_custom_call.1} parent=1 // pred_check
      _
    $region11: #{tpu_custom_call.1} parent=1 // pred_check_branch
      %49 = sbr.rel (0) target = $region13
    $region12: #{tpu_custom_call.1} parent=1 // pred_region
      %50 = dma.done [#allocation3], 2048
    $region13: #{tpu_custom_call.1} parent=1 // pred_fallthru
      _
    // Predicated region
    $region14: #{tpu_custom_call.1} parent=1 // pred_check
      _
    $region15: #{tpu_custom_call.1} parent=1 // pred_check_branch
      %52 = sbr.rel (0) target = $region17
    $region16: #{tpu_custom_call.1} parent=1 // pred_region
      %53 = dma.done [#allocation6], 2048
    $region17: #{tpu_custom_call.1} parent=1 // pred_fallthru
      _
    %s54 = sadd.s32 0, 0
    %p55 = scmp.lt.s32.totalorder %s54, 0
    %s56 = scalar_select %p55, %s54, 0
    %s57 = smul.u32 4, %s56
    %s58 = sadd.s32 0, 0
    %p59 = scmp.lt.s32.totalorder %s58, 0
    %s60 = scalar_select %p59, %s58, 0
    %s61 = smul.u32 4, %s60
    %p62 = scmp.eq.s32.totalorder 0, 0
    // Predicated region
    $region18: #{tpu_custom_call.1} parent=1 // pred_check
      %p63 = pneg %p62
    $region19: #{tpu_custom_call.1} parent=1 // pred_check_branch
      %65 = sbr.rel (%p63) target = $region21
    $region20: #{tpu_custom_call.1} parent=1 // pred_region
      %66 = vst [vmem:[#allocation7] sm:$0xff] 0
      %67 = vst [vmem:[#allocation7 + $0x8] sm:$0xff] 0
      %68 = vst [vmem:[#allocation7 + $0x10] sm:$0xff] 0
      %69 = vst [vmem:[#allocation7 + $0x18] sm:$0xff] 0
    $region21: #{tpu_custom_call.1} parent=1 // pred_fallthru
      _
    %s70 = sadd.s32 0, 0
    %s71 = smul.u32 %s70, 32
    %s72 = ssub.s32 32, %s71
    %v73 = vlaneseq
    %v74 = vshrl.u32 %v73, 7
    %v75 = vadd.s32 %v74, 8
    %v76 = vadd.s32 %v74, 16
    %v77 = vadd.s32 %v74, 24
    %v78 = vstv %s72
    %vm79 = vcmp.lt.s32.totalorder %v74, %v78
    %vm80 = vcmp.lt.s32.totalorder %v75, %v78
    %vm81 = vcmp.lt.s32.totalorder %v76, %v78
    %vm82 = vcmp.lt.s32.totalorder %v77, %v78
    %v83 = vld [vmem:[#allocation2] sm:$0xff]
    %v84 = vld [vmem:[#allocation2 + $0x8] sm:$0xff]
    %v85 = vld [vmem:[#allocation2 + $0x10] sm:$0xff]
    %v86 = vld [vmem:[#allocation2 + $0x18] sm:$0xff]
    %v87 = vld [vmem:[#allocation2 + $0x20] sm:$0xff]
    %v88 = vld [vmem:[#allocation2 + $0x28] sm:$0xff]
    %v89 = vld [vmem:[#allocation2 + $0x30] sm:$0xff]
    %v90 = vld [vmem:[#allocation2 + $0x38] sm:$0xff]
    %v91 = vld [vmem:[#allocation2 + $0x40] sm:$0xff]
    %v92 = vld [vmem:[#allocation2 + $0x48] sm:$0xff]
    %v93 = vld [vmem:[#allocation2 + $0x50] sm:$0xff]
    %v94 = vld [vmem:[#allocation2 + $0x58] sm:$0xff]
    %v95 = vld [vmem:[#allocation2 + $0x60] sm:$0xff]
    %v96 = vld [vmem:[#allocation2 + $0x68] sm:$0xff]
    %v97 = vld [vmem:[#allocation2 + $0x70] sm:$0xff]
    %v98 = vld [vmem:[#allocation2 + $0x78] sm:$0xff]
    %v99 = vld [vmem:[#allocation5] sm:$0xff]
    %v100 = vld [vmem:[#allocation5 + $0x8] sm:$0xff]
    %v101 = vld [vmem:[#allocation5 + $0x10] sm:$0xff]
    %v102 = vld [vmem:[#allocation5 + $0x18] sm:$0xff]
    %v103 = vld [vmem:[#allocation5 + $0x20] sm:$0xff]
    %v104 = vld [vmem:[#allocation5 + $0x28] sm:$0xff]
    %v105 = vld [vmem:[#allocation5 + $0x30] sm:$0xff]
    %v106 = vld [vmem:[#allocation5 + $0x38] sm:$0xff]
    %v107 = vld [vmem:[#allocation5 + $0x40] sm:$0xff]
    %v108 = vld [vmem:[#allocation5 + $0x48] sm:$0xff]
    %v109 = vld [vmem:[#allocation5 + $0x50] sm:$0xff]
    %v110 = vld [vmem:[#allocation5 + $0x58] sm:$0xff]
    %v111 = vld [vmem:[#allocation5 + $0x60] sm:$0xff]
    %v112 = vld [vmem:[#allocation5 + $0x68] sm:$0xff]
    %v113 = vld [vmem:[#allocation5 + $0x70] sm:$0xff]
    %v114 = vld [vmem:[#allocation5 + $0x78] sm:$0xff]
    %vm115 = vcmp.eq.s32.totalorder %v83, %v99
    %vm116 = vcmp.eq.s32.totalorder %v84, %v100
    %vm117 = vcmp.eq.s32.totalorder %v85, %v101
    %vm118 = vcmp.eq.s32.totalorder %v86, %v102
    %vm119 = vcmp.eq.s32.totalorder %v87, %v103
    %vm120 = vcmp.eq.s32.totalorder %v88, %v104
    %vm121 = vcmp.eq.s32.totalorder %v89, %v105
    %vm122 = vcmp.eq.s32.totalorder %v90, %v106
    %vm123 = vcmp.eq.s32.totalorder %v91, %v107
    %vm124 = vcmp.eq.s32.totalorder %v92, %v108
    %vm125 = vcmp.eq.s32.totalorder %v93, %v109
    %vm126 = vcmp.eq.s32.totalorder %v94, %v110
    %vm127 = vcmp.eq.s32.totalorder %v95, %v111
    %vm128 = vcmp.eq.s32.totalorder %v96, %v112
    %vm129 = vcmp.eq.s32.totalorder %v97, %v113
    %vm130 = vcmp.eq.s32.totalorder %v98, %v114
    %vm131 = vmand %vm115, %vm79
    %vm132 = vmand %vm116, %vm79
    %vm133 = vmand %vm117, %vm79
    %vm134 = vmand %vm118, %vm79
    %vm135 = vmand %vm119, %vm80
    %vm136 = vmand %vm120, %vm80
    %vm137 = vmand %vm121, %vm80
    %vm138 = vmand %vm122, %vm80
    %vm139 = vmand %vm123, %vm81
    %vm140 = vmand %vm124, %vm81
    %vm141 = vmand %vm125, %vm81
    %vm142 = vmand %vm126, %vm81
    %vm143 = vmand %vm127, %vm82
    %vm144 = vmand %vm128, %vm82
    %vm145 = vmand %vm129, %vm82
    %vm146 = vmand %vm130, %vm82
    %v147 = vsel %vm131, 1, 0
    %v148 = vsel %vm132, 1, 0
    %v149 = vsel %vm133, 1, 0
    %v150 = vsel %vm134, 1, 0
    %v151 = vsel %vm135, 1, 0
    %v152 = vsel %vm136, 1, 0
    %v153 = vsel %vm137, 1, 0
    %v154 = vsel %vm138, 1, 0
    %v155 = vsel %vm139, 1, 0
    %v156 = vsel %vm140, 1, 0
    %v157 = vsel %vm141, 1, 0
    %v158 = vsel %vm142, 1, 0
    %v159 = vsel %vm143, 1, 0
    %v160 = vsel %vm144, 1, 0
    %v161 = vsel %vm145, 1, 0
    %v162 = vsel %vm146, 1, 0
    %v163 = vld [vmem:[#allocation7] sm:$0xff]
    %v164 = vld [vmem:[#allocation7 + $0x8] sm:$0xff]
    %v165 = vld [vmem:[#allocation7 + $0x10] sm:$0xff]
    %v166 = vld [vmem:[#allocation7 + $0x18] sm:$0xff]
    %v167 = vadd.s32 %v147, %v151
    %v168 = vadd.s32 %v167, %v155
    %v169 = vadd.s32 %v168, %v159
    %v170 = vadd.s32 %v148, %v152
    %v171 = vadd.s32 %v170, %v156
    %v172 = vadd.s32 %v171, %v160
    %v173 = vadd.s32 %v149, %v153
    %v174 = vadd.s32 %v173, %v157
    %v175 = vadd.s32 %v174, %v161
    %v176 = vadd.s32 %v150, %v154
    %v177 = vadd.s32 %v176, %v158
    %v178 = vadd.s32 %v177, %v162
    %v179 = vadd.s32 %v163, %v169
    %v180 = vadd.s32 %v164, %v172
    %v181 = vadd.s32 %v165, %v175
    %v182 = vadd.s32 %v166, %v178
    %183 = vst [vmem:[#allocation7] sm:$0xff] %v179
    %184 = vst [vmem:[#allocation7 + $0x8] sm:$0xff] %v180
    %185 = vst [vmem:[#allocation7 + $0x10] sm:$0xff] %v181
    %186 = vst [vmem:[#allocation7 + $0x18] sm:$0xff] %v182
    // Predicated region
    $region22: #{tpu_custom_call.1} parent=1 // pred_check
      _
    $region23: #{tpu_custom_call.1} parent=1 // pred_check_branch
      %188 = sbr.rel (0) target = $region25
    $region24: #{tpu_custom_call.1} parent=1 // pred_region
      %s190 = ssub.s32 512, 512
      %191 = vsyncadd [#allocation4], %s190
      %s193 = sshll.u32 [#allocation7], 4
      %s194 = int_to_ptr.vmem [resolvable:$true] %s193
      %196 = dma.vmem_to_hbm [thread:$0]  %s194, 512, %s2, [#allocation4]
    $region25: #{tpu_custom_call.1} parent=1 // pred_fallthru
      _
    // Predicated region
    $region26: #{tpu_custom_call.1} parent=1 // pred_check
      _
    $region27: #{tpu_custom_call.1} parent=1 // pred_check_branch
      %198 = sbr.rel (0) target = $region29
    $region28: #{tpu_custom_call.1} parent=1 // pred_region
      %199 = dma.done [#allocation4], 512
    $region29: #{tpu_custom_call.1} parent=1 // pred_fallthru
      _
    %200 = vsyncpa [#allocation3], 1
    %201 = vsyncpa [#allocation6], 1
    %202 = vsyncpa [#allocation4], 1

</llo_original>
